<compile_context>
chip_gen: v5e
topology: v5e:2x2
jax: 0.10.0
libtpu: 0.0.40
codegen_flags: <defaults>
</compile_context>

<pallas_src>
import jax
import jax.numpy as jnp
from jax.experimental import pallas as pl
from jax.experimental.pallas import tpu as pltpu


IN_FEATURES = 28 * 28    # 784
HIDDEN = 110
HIDDEN_PAD = 128         # MXU/lane-aligned hidden width (zero-padded)
OUT_FEATURES = 10
LANE = 128               # lane-dense padded output width
NEG_BIG = -1e30          # padded-lane mask baked into b2 (NOT -inf: keeps max/sub finite)


def _round_up(n, m):
    return ((n + m - 1) // m) * m


def _tb_max_for_device():
    """Per-chip cap on the batch tile.  v6e/v7x HBM is fast enough that larger
    tiles pay off; v5e (and unknown chips) stay at 1024 to respect the 16 MiB
    scoped-VMEM default."""
    try:
        kind = jax.devices()[0].device_kind.lower()
    except Exception:
        return 1024
    if ("v6" in kind) or ("v7" in kind) or ("7x" in kind):
        return 2048
    return 1024


def _choose_tiling(B, tb_max):
    """Pick (TB, B_pad) so that: rows are a multiple of 8 (f32 sublane), the
    grid has >= 4 steps when the batch allows it (pipelining + v7x megacore),
    TB <= tb_max, and padding waste is < one tile."""
    B8 = _round_up(max(B, 1), 8)
    n_steps = max(4, pl.cdiv(B8, tb_max))
    TB = min(tb_max, _round_up(pl.cdiv(B8, n_steps), 8))
    B_pad = _round_up(B8, TB)
    return TB, B_pad


def netfull_kernel(x_ref, w1_ref, b1_ref, w2_ref, b2_ref, o_ref):
    # x_ref : (TB, 784)     w1_ref : (784, 128)   b1_ref : (1, 128)
    # w2_ref: (128, 128)    b2_ref : (1, 128)     o_ref  : (TB, 128)
    x = x_ref[...]

    # Linear(784 -> 128-padded-110) + tanh  (MXU matmul, f32 accumulation).
    h = jnp.tanh(
        jnp.dot(x, w1_ref[...], preferred_element_type=jnp.float32) + b1_ref[...]
    )

    # Linear(128 -> 128-padded-10); padded w2 columns are zero and the padded
    # b2 lanes are -1e30, so padded lanes are already excluded from softmax.
    logits = jnp.dot(h, w2_ref[...], preferred_element_type=jnp.float32) + b2_ref[...]

    # Stable log_softmax along the last axis (PyTorch dim=1).
    m = jnp.max(logits, axis=-1, keepdims=True)
    shifted = logits - m
    lse = jnp.log(jnp.sum(jnp.exp(shifted), axis=-1, keepdims=True))
    o_ref[...] = (shifted - lse).astype(o_ref.dtype)


def netfull_forward(x_nchw, w1, b1, w2, b2):
    """x_nchw: (B, 1, 28, 28) float32 -> (B, 10) log-probabilities."""
    B = x_nchw.shape[0]
    x_flat = x_nchw.reshape(B, -1).astype(jnp.float32)   # torch .view(B, -1)

    TB, B_pad = _choose_tiling(B, _tb_max_for_device())
    if B_pad != B:
        x_flat = jnp.pad(x_flat, ((0, B_pad - B), (0, 0)))

    # Zero-pad hidden dim 110 -> 128: extra hidden units are tanh(0+0)=0 and
    # their w2 rows are zero, so they contribute nothing.
    w1_p = jnp.zeros((IN_FEATURES, HIDDEN_PAD), jnp.float32).at[:, :HIDDEN].set(w1)
    b1_p = jnp.zeros((1, HIDDEN_PAD), jnp.float32).at[:, :HIDDEN].set(
        b1.reshape(1, HIDDEN))

    # Zero-pad output dim 10 -> 128 (lane-dense stores); bake the -1e30 mask
    # into the padded bias lanes so the kernel needs no iota/where.
    w2_p = jnp.zeros((HIDDEN_PAD, LANE), jnp.float32).at[:HIDDEN, :OUT_FEATURES].set(w2)
    b2_p = jnp.full((1, LANE), NEG_BIG, jnp.float32).at[:, :OUT_FEATURES].set(
        b2.reshape(1, OUT_FEATURES))

    grid = (B_pad // TB,)
    out_padded = pl.pallas_call(
        netfull_kernel,
        out_shape=jax.ShapeDtypeStruct((B_pad, LANE), jnp.float32),
        grid=grid,
        in_specs=[
            # Batch-tiled input: pipelined / double-buffered across the grid.
            pl.BlockSpec((TB, IN_FEATURES), lambda i: (i, 0)),
            # Grid-invariant weights/biases: VMEM-resident, never re-DMA'd.
            pl.BlockSpec((IN_FEATURES, HIDDEN_PAD), lambda i: (0, 0)),
            pl.BlockSpec((1, HIDDEN_PAD), lambda i: (0, 0)),
            pl.BlockSpec((HIDDEN_PAD, LANE), lambda i: (0, 0)),
            pl.BlockSpec((1, LANE), lambda i: (0, 0)),
        ],
        out_specs=pl.BlockSpec((TB, LANE), lambda i: (i, 0)),
        compiler_params=pltpu.CompilerParams(
            dimension_semantics=("parallel",),
            vmem_limit_bytes=32 * 1024 * 1024,
        ),
    )(x_flat, w1_p, b1_p, w2_p, b2_p)

    return out_padded[:B, :OUT_FEATURES]


def init_params(key):
    """Deterministic init mimicking nn.Linear's U(-1/sqrt(fan_in), 1/sqrt(fan_in))."""
    k1, k2, k3, k4 = jax.random.split(key, 4)
    lim1 = 1.0 / jnp.sqrt(jnp.float32(IN_FEATURES))
    lim2 = 1.0 / jnp.sqrt(jnp.float32(HIDDEN))
    w1 = jax.random.uniform(k1, (IN_FEATURES, HIDDEN), jnp.float32, -lim1, lim1)
    b1 = jax.random.uniform(k2, (HIDDEN,), jnp.float32, -lim1, lim1)
    w2 = jax.random.uniform(k3, (HIDDEN, OUT_FEATURES), jnp.float32, -lim2, lim2)
    b2 = jax.random.uniform(k4, (OUT_FEATURES,), jnp.float32, -lim2, lim2)
    return w1, b1, w2, b2


def reference_forward(x_nchw, w1, b1, w2, b2):
    x = x_nchw.reshape(x_nchw.shape[0], -1)
    h = jnp.tanh(x @ w1 + b1)
    logits = h @ w2 + b2
    return jax.nn.log_softmax(logits, axis=-1)


if __name__ == "__main__":
    key = jax.random.PRNGKey(0)
    k_x, k_p = jax.random.split(key)

    w1, b1, w2, b2 = init_params(k_p)

    # Small batch (single grid step).
    B = 2
    x = jax.random.normal(k_x, (B, 1, 28, 28), jnp.float32)
    out = jax.block_until_ready(netfull_forward(x, w1, b1, w2, b2))
    ref = reference_forward(x, w1, b1, w2, b2)
    assert out.shape == (B, OUT_FEATURES)
    assert jnp.allclose(out, ref, atol=1e-5, rtol=1e-5), "mismatch vs reference"

    # Ragged batch (not a multiple of 8; exercises padding + multi-step grid).
    B2 = 13
    x2 = jax.random.normal(jax.random.PRNGKey(7), (B2, 1, 28, 28), jnp.float32)
    out2 = jax.block_until_ready(netfull_forward(x2, w1, b1, w2, b2))
    ref2 = reference_forward(x2, w1, b1, w2, b2)
    assert out2.shape == (B2, OUT_FEATURES)
    assert jnp.allclose(out2, ref2, atol=1e-5, rtol=1e-5), "mismatch vs reference (ragged)"

    print("KERNEL_OK")
</pallas_src>

<mosaic_0001>
module attributes {stable_mosaic.version = 11 : i64} {
  func.func @netfull_kernel(%arg0: i32, %arg1: memref<8x784xf32, #tpu.memory_space<vmem>>, %arg2: memref<784x128xf32, #tpu.memory_space<vmem>>, %arg3: memref<1x128xf32, #tpu.memory_space<vmem>>, %arg4: memref<128x128xf32, #tpu.memory_space<vmem>>, %arg5: memref<1x128xf32, #tpu.memory_space<vmem>>, %arg6: memref<8x128xf32, #tpu.memory_space<vmem>>) attributes {dimension_semantics = [#tpu.dimension_semantics<parallel>], iteration_bounds = array<i64: 1>, scalar_prefetch = 0 : i64, scratch_operands = 0 : i64, tpu.core_type = #tpu.core_type<tc>, window_params = [{transform_indices = @transform_0, window_bounds = array<i64: 8, 784>}, {pipeline_mode = #tpu.pipeline_mode<synchronous>, transform_indices = @transform_1, window_bounds = array<i64: 784, 128>}, {pipeline_mode = #tpu.pipeline_mode<synchronous>, transform_indices = @transform_2, window_bounds = array<i64: 1, 128>}, {pipeline_mode = #tpu.pipeline_mode<synchronous>, transform_indices = @transform_3, window_bounds = array<i64: 128, 128>}, {pipeline_mode = #tpu.pipeline_mode<synchronous>, transform_indices = @transform_4, window_bounds = array<i64: 1, 128>}, {transform_indices = @transform_5, window_bounds = array<i64: 8, 128>}]} {
    %c0 = arith.constant 0 : index
    %c0_0 = arith.constant 0 : index
    %0 = vector.load %arg1[%c0, %c0_0] : memref<8x784xf32, #tpu.memory_space<vmem>>, vector<8x784xf32>
    %c0_1 = arith.constant 0 : index
    %c0_2 = arith.constant 0 : index
    %1 = vector.load %arg2[%c0_1, %c0_2] : memref<784x128xf32, #tpu.memory_space<vmem>>, vector<784x128xf32>
    %cst = arith.constant dense<0.000000e+00> : vector<8x128xf32>
    %2 = tpu.matmul %0, %1, %cst {dimension_numbers = #tpu.dot_dimension_numbers<[1], [0], [0], [1], [0, 0, 1, 1], [], []>} : vector<8x784xf32>, vector<784x128xf32>, vector<8x128xf32> -> vector<8x128xf32>
    %c0_3 = arith.constant 0 : index
    %c0_4 = arith.constant 0 : index
    %3 = vector.load %arg3[%c0_3, %c0_4] : memref<1x128xf32, #tpu.memory_space<vmem>>, vector<1x128xf32>
    %4 = vector.broadcast %3 : vector<1x128xf32> to vector<8x128xf32>
    %5 = arith.addf %2, %4 : vector<8x128xf32>
    %6 = math.tanh %5 : vector<8x128xf32>
    %c0_5 = arith.constant 0 : index
    %c0_6 = arith.constant 0 : index
    %7 = vector.load %arg4[%c0_5, %c0_6] : memref<128x128xf32, #tpu.memory_space<vmem>>, vector<128x128xf32>
    %cst_7 = arith.constant dense<0.000000e+00> : vector<8x128xf32>
    %8 = tpu.matmul %6, %7, %cst_7 {dimension_numbers = #tpu.dot_dimension_numbers<[1], [0], [0], [1], [0, 0, 1, 1], [], []>} : vector<8x128xf32>, vector<128x128xf32>, vector<8x128xf32> -> vector<8x128xf32>
    %c0_8 = arith.constant 0 : index
    %c0_9 = arith.constant 0 : index
    %9 = vector.load %arg5[%c0_8, %c0_9] : memref<1x128xf32, #tpu.memory_space<vmem>>, vector<1x128xf32>
    %10 = vector.broadcast %9 : vector<1x128xf32> to vector<8x128xf32>
    %11 = arith.addf %8, %10 : vector<8x128xf32>
    %cst_10 = arith.constant dense<0xFF800000> : vector<8xf32>
    %12 = vector.multi_reduction <maximumf>, %11, %cst_10 [1] : vector<8x128xf32> to vector<8xf32>
    %13 = vector.shape_cast %12 : vector<8xf32> to vector<8x1xf32>
    %14 = vector.broadcast %13 : vector<8x1xf32> to vector<8x128xf32>
    %15 = arith.subf %11, %14 : vector<8x128xf32>
    %16 = math.exp %15 : vector<8x128xf32>
    %cst_11 = arith.constant dense<0.000000e+00> : vector<8xf32>
    %17 = vector.multi_reduction <add>, %16, %cst_11 [1] : vector<8x128xf32> to vector<8xf32>
    %18 = vector.shape_cast %17 : vector<8xf32> to vector<8x1xf32>
    %19 = math.log %18 : vector<8x1xf32>
    %20 = vector.broadcast %19 : vector<8x1xf32> to vector<8x128xf32>
    %21 = arith.subf %15, %20 : vector<8x128xf32>
    %c0_12 = arith.constant 0 : index
    %c0_13 = arith.constant 0 : index
    %22 = vector.load %arg6[%c0_12, %c0_13] : memref<8x128xf32, #tpu.memory_space<vmem>>, vector<8x128xf32>
    tpu.vector_store %arg6[%c0_12, %c0_13], %21 {strides = array<i32>} : memref<8x128xf32, #tpu.memory_space<vmem>>, vector<8x128xf32>,
    return
  }
  func.func @transform_0(%arg0: i32) -> (i32, i32) {
    %c0_i32 = arith.constant 0 : i32
    %c0_i32_0 = arith.constant 0 : i32
    return %arg0, %c0_i32 : i32, i32
  }
  func.func @transform_1(%arg0: i32) -> (i32, i32) {
    %c0_i32 = arith.constant 0 : i32
    %c0_i32_0 = arith.constant 0 : i32
    %c0_i32_1 = arith.constant 0 : i32
    return %c0_i32, %c0_i32_0 : i32, i32
  }
  func.func @transform_2(%arg0: i32) -> (i32, i32) {
    %c0_i32 = arith.constant 0 : i32
    %c0_i32_0 = arith.constant 0 : i32
    %c0_i32_1 = arith.constant 0 : i32
    return %c0_i32, %c0_i32_0 : i32, i32
  }
  func.func @transform_3(%arg0: i32) -> (i32, i32) {
    %c0_i32 = arith.constant 0 : i32
    %c0_i32_0 = arith.constant 0 : i32
    %c0_i32_1 = arith.constant 0 : i32
    return %c0_i32, %c0_i32_0 : i32, i32
  }
  func.func @transform_4(%arg0: i32) -> (i32, i32) {
    %c0_i32 = arith.constant 0 : i32
    %c0_i32_0 = arith.constant 0 : i32
    %c0_i32_1 = arith.constant 0 : i32
    return %c0_i32, %c0_i32_0 : i32, i32
  }
  func.func @transform_5(%arg0: i32) -> (i32, i32) {
    %c0_i32 = arith.constant 0 : i32
    %c0_i32_0 = arith.constant 0 : i32
    return %arg0, %c0_i32 : i32, i32
  }
}

</mosaic_0001>

<llo_original>
// kernel: tpu_custom_call.1
$region0: #{tpu_custom_call.1}
  #allocation0 [shape = 'u32[]', space=smem, size = 0x4, offset = 0x4, fixed_abs, tag = 'smem constant byte address 0x4 - core index']
  #allocation1 [shape = 'u32[72,128]{1,0:T(1,128)}', space=vmem, size = 0x9000, scoped, tag = 'internal scratch']
  %s0 = inlined_call_operand.hbm [shape: f32[8,784], index: 0, kind: input, shape index: {}]
  %s1 = inlined_call_operand.hbm [shape: f32[784,128], index: 1, kind: input, shape index: {}]
  %s2 = inlined_call_operand.vmem [shape: f32[1,128], index: 2, kind: input, shape index: {}]
  %s3 = inlined_call_operand.hbm [shape: f32[128,128], index: 3, kind: input, shape index: {}]
  %s4 = inlined_call_operand.vmem [shape: f32[1,128], index: 4, kind: input, shape index: {}]
  %s5 = inlined_call_operand.hbm [shape: f32[8,128], index: 5, kind: output, shape index: {}]
  %s6 = sld [smem:[#allocation0]]
  $region42: #{tpu_custom_call.1} parent=0
    _
  %s8 = ssub.s32 1, %s6
  %s9 = scalar_select 0, %s8, %s6
  $region1: #{tpu_custom_call.1} parent=0
    #allocation2 [shape = 'u8[28672]{0}', space=vmem, size = 0x7000, scoped, tag = 'input window, operand 0, single buffered']
    #allocation3 [shape = 's32[1]{0}', space=sflag, size = 0x4, scoped, tag = 'scoped memory for tpu_custom_call.1']
    #allocation4 [shape = 's32[1]{0}', space=sflag, size = 0x4, scoped, tag = 'scoped memory for tpu_custom_call.1']
    #allocation5 [shape = 'u8[401408]{0}', space=vmem, size = 0x62000, scoped, tag = 'input window, operand 1, single buffered']
    #allocation6 [shape = 's32[1]{0}', space=sflag, size = 0x4, scoped, tag = 'scoped memory for tpu_custom_call.1']
    #allocation7 [shape = 'u8[65536]{0}', space=vmem, size = 0x10000, scoped, tag = 'input window, operand 3, single buffered']
    #allocation8 [shape = 'u8[4096]{0}', space=vmem, size = 0x1000, scoped, tag = 'output window, operand 0, single buffered']
    %10 = vsyncpa [#allocation3], 0
    %11 = vsyncpa [#allocation6], 0
    %12 = vsyncpa [#allocation4], 0
    // Predicated region
    $region2: #{tpu_custom_call.1} parent=1 // pred_check
      _
    $region3: #{tpu_custom_call.1} parent=1 // pred_check_branch
      %14 = sbr.rel (0) target = $region5
    $region4: #{tpu_custom_call.1} parent=1 // pred_region
      %16 = vsyncadd [#allocation3], 0
      %s18 = sshll.u32 %s0, 4
      %s19 = int_to_ptr.hbm [resolvable:$true] %s18
      %s20 = sshll.u32 [#allocation2], 4
      %s21 = int_to_ptr.vmem [resolvable:$true] %s20
      %23 = dma.hbm_to_vmem [thread:$0]  %s19, 896, %s21, [#allocation3]
    $region5: #{tpu_custom_call.1} parent=1 // pred_fallthru
      _
    // Predicated region
    $region6: #{tpu_custom_call.1} parent=1 // pred_check
      _
    $region7: #{tpu_custom_call.1} parent=1 // pred_check_branch
      %25 = sbr.rel (0) target = $region9
    $region8: #{tpu_custom_call.1} parent=1 // pred_region
      %27 = vsyncadd [#allocation6], 0
      %s28 = sshll.u32 %s1, 4
      %s29 = int_to_ptr.hbm [resolvable:$true] %s28
      %s30 = sshll.u32 [#allocation5], 4
      %s31 = int_to_ptr.vmem [resolvable:$true] %s30
      %36 = dma.hbm_to_vmem [thread:$0]  %s29, 12544, %s31, [#allocation6], 128, 128, 8
    $region9: #{tpu_custom_call.1} parent=1 // pred_fallthru
      _
    // Predicated region
    $region10: #{tpu_custom_call.1} parent=1 // pred_check
      _
    $region11: #{tpu_custom_call.1} parent=1 // pred_check_branch
      %38 = sbr.rel (0) target = $region13
    $region12: #{tpu_custom_call.1} parent=1 // pred_region
      _
    $region13: #{tpu_custom_call.1} parent=1 // pred_fallthru
      _
    // Predicated region
    $region14: #{tpu_custom_call.1} parent=1 // pred_check
      _
    $region15: #{tpu_custom_call.1} parent=1 // pred_check_branch
      %40 = sbr.rel (0) target = $region17
    $region16: #{tpu_custom_call.1} parent=1 // pred_region
      %42 = vsyncadd [#allocation6], 0
      %s43 = sshll.u32 %s3, 4
      %s44 = int_to_ptr.hbm [resolvable:$true] %s43
      %s45 = sshll.u32 [#allocation7], 4
      %s46 = int_to_ptr.vmem [resolvable:$true] %s45
      %51 = dma.hbm_to_vmem [thread:$0]  %s44, 2048, %s46, [#allocation6], 128, 128, 8
    $region17: #{tpu_custom_call.1} parent=1 // pred_fallthru
      _
    // Predicated region
    $region18: #{tpu_custom_call.1} parent=1 // pred_check
      _
    $region19: #{tpu_custom_call.1} parent=1 // pred_check_branch
      %53 = sbr.rel (0) target = $region21
    $region20: #{tpu_custom_call.1} parent=1 // pred_region
      _
    $region21: #{tpu_custom_call.1} parent=1 // pred_fallthru
      _
    // Predicated region
    $region22: #{tpu_custom_call.1} parent=1 // pred_check
      _
    $region23: #{tpu_custom_call.1} parent=1 // pred_check_branch
      %55 = sbr.rel (0) target = $region25
    $region24: #{tpu_custom_call.1} parent=1 // pred_region
      %57 = dma.done [#allocation3], 896
    $region25: #{tpu_custom_call.1} parent=1 // pred_fallthru
      _
    // Predicated region
    $region26: #{tpu_custom_call.1} parent=1 // pred_check
      _
    $region27: #{tpu_custom_call.1} parent=1 // pred_check_branch
      %59 = sbr.rel (0) target = $region29
    $region28: #{tpu_custom_call.1} parent=1 // pred_region
      %61 = dma.done [#allocation6], 12544
    $region29: #{tpu_custom_call.1} parent=1 // pred_fallthru
      _
    // Predicated region
    $region30: #{tpu_custom_call.1} parent=1 // pred_check
      _
    $region31: #{tpu_custom_call.1} parent=1 // pred_check_branch
      %63 = sbr.rel (0) target = $region33
    $region32: #{tpu_custom_call.1} parent=1 // pred_region
      %65 = dma.done [#allocation6], 2048
    $region33: #{tpu_custom_call.1} parent=1 // pred_fallthru
      _
    %v66 = vld [vmem:[#allocation2] sm:$0xff]
    %v67 = vld [vmem:[#allocation2 + $0x8] sm:$0xff]
    %v68 = vld [vmem:[#allocation2 + $0x10] sm:$0xff]
    %v69 = vld [vmem:[#allocation2 + $0x18] sm:$0xff]
    %v70 = vld [vmem:[#allocation2 + $0x20] sm:$0xff]
    %v71 = vld [vmem:[#allocation2 + $0x28] sm:$0xff]
    %v72 = vld [vmem:[#allocation2 + $0x30] sm:$0xff]
    %v73 = vld [vmem:[#allocation5] sm:$0xff]
    %v74 = vld [vmem:[#allocation5 + $0x8] sm:$0xff]
    %v75 = vld [vmem:[#allocation5 + $0x10] sm:$0xff]
    %v76 = vld [vmem:[#allocation5 + $0x18] sm:$0xff]
    %v77 = vld [vmem:[#allocation5 + $0x20] sm:$0xff]
    %v78 = vld [vmem:[#allocation5 + $0x28] sm:$0xff]
    %v79 = vld [vmem:[#allocation5 + $0x30] sm:$0xff]
    %v80 = vld [vmem:[#allocation5 + $0x38] sm:$0xff]
    %v81 = vld [vmem:[#allocation5 + $0x40] sm:$0xff]
    %v82 = vld [vmem:[#allocation5 + $0x48] sm:$0xff]
    %v83 = vld [vmem:[#allocation5 + $0x50] sm:$0xff]
    %v84 = vld [vmem:[#allocation5 + $0x58] sm:$0xff]
    %v85 = vld [vmem:[#allocation5 + $0x60] sm:$0xff]
    %v86 = vld [vmem:[#allocation5 + $0x68] sm:$0xff]
    %v87 = vld [vmem:[#allocation5 + $0x70] sm:$0xff]
    %v88 = vld [vmem:[#allocation5 + $0x78] sm:$0xff]
    %v89 = vld [vmem:[#allocation5 + $0x80] sm:$0xff]
    %v90 = vld [vmem:[#allocation5 + $0x88] sm:$0xff]
    %v91 = vld [vmem:[#allocation5 + $0x90] sm:$0xff]
    %v92 = vld [vmem:[#allocation5 + $0x98] sm:$0xff]
    %v93 = vld [vmem:[#allocation5 + $0xa0] sm:$0xff]
    %v94 = vld [vmem:[#allocation5 + $0xa8] sm:$0xff]
    %v95 = vld [vmem:[#allocation5 + $0xb0] sm:$0xff]
    %v96 = vld [vmem:[#allocation5 + $0xb8] sm:$0xff]
    %v97 = vld [vmem:[#allocation5 + $0xc0] sm:$0xff]
    %v98 = vld [vmem:[#allocation5 + $0xc8] sm:$0xff]
    %v99 = vld [vmem:[#allocation5 + $0xd0] sm:$0xff]
    %v100 = vld [vmem:[#allocation5 + $0xd8] sm:$0xff]
    %v101 = vld [vmem:[#allocation5 + $0xe0] sm:$0xff]
    %v102 = vld [vmem:[#allocation5 + $0xe8] sm:$0xff]
    %v103 = vld [vmem:[#allocation5 + $0xf0] sm:$0xff]
    %v104 = vld [vmem:[#allocation5 + $0xf8] sm:$0xff]
    %v105 = vld [vmem:[#allocation5 + $0x100] sm:$0xff]
    %v106 = vld [vmem:[#allocation5 + $0x108] sm:$0xff]
    %v107 = vld [vmem:[#allocation5 + $0x110] sm:$0xff]
    %v108 = vld [vmem:[#allocation5 + $0x118] sm:$0xff]
    %v109 = vld [vmem:[#allocation5 + $0x120] sm:$0xff]
    %v110 = vld [vmem:[#allocation5 + $0x128] sm:$0xff]
    %v111 = vld [vmem:[#allocation5 + $0x130] sm:$0xff]
    %v112 = vld [vmem:[#allocation5 + $0x138] sm:$0xff]
    %v113 = vld [vmem:[#allocation5 + $0x140] sm:$0xff]
    %v114 = vld [vmem:[#allocation5 + $0x148] sm:$0xff]
    %v115 = vld [vmem:[#allocation5 + $0x150] sm:$0xff]
    %v116 = vld [vmem:[#allocation5 + $0x158] sm:$0xff]
    %v117 = vld [vmem:[#allocation5 + $0x160] sm:$0xff]
    %v118 = vld [vmem:[#allocation5 + $0x168] sm:$0xff]
    %v119 = vld [vmem:[#allocation5 + $0x170] sm:$0xff]
    %v120 = vld [vmem:[#allocation5 + $0x178] sm:$0xff]
    %v121 = vld [vmem:[#allocation5 + $0x180] sm:$0xff]
    %v122 = vld [vmem:[#allocation5 + $0x188] sm:$0xff]
    %v123 = vld [vmem:[#allocation5 + $0x190] sm:$0xff]
    %v124 = vld [vmem:[#allocation5 + $0x198] sm:$0xff]
    %v125 = vld [vmem:[#allocation5 + $0x1a0] sm:$0xff]
    %v126 = vld [vmem:[#allocation5 + $0x1a8] sm:$0xff]
    %v127 = vld [vmem:[#allocation5 + $0x1b0] sm:$0xff]
    %v128 = vld [vmem:[#allocation5 + $0x1b8] sm:$0xff]
    %v129 = vld [vmem:[#allocation5 + $0x1c0] sm:$0xff]
    %v130 = vld [vmem:[#allocation5 + $0x1c8] sm:$0xff]
    %v131 = vld [vmem:[#allocation5 + $0x1d0] sm:$0xff]
    %v132 = vld [vmem:[#allocation5 + $0x1d8] sm:$0xff]
    %v133 = vld [vmem:[#allocation5 + $0x1e0] sm:$0xff]
    %v134 = vld [vmem:[#allocation5 + $0x1e8] sm:$0xff]
    %v135 = vld [vmem:[#allocation5 + $0x1f0] sm:$0xff]
    %v136 = vld [vmem:[#allocation5 + $0x1f8] sm:$0xff]
    %v137 = vld [vmem:[#allocation5 + $0x200] sm:$0xff]
    %v138 = vld [vmem:[#allocation5 + $0x208] sm:$0xff]
    %v139 = vld [vmem:[#allocation5 + $0x210] sm:$0xff]
    %v140 = vld [vmem:[#allocation5 + $0x218] sm:$0xff]
    %v141 = vld [vmem:[#allocation5 + $0x220] sm:$0xff]
    %v142 = vld [vmem:[#allocation5 + $0x228] sm:$0xff]
    %v143 = vld [vmem:[#allocation5 + $0x230] sm:$0xff]
    %v144 = vld [vmem:[#allocation5 + $0x238] sm:$0xff]
    %v145 = vld [vmem:[#allocation5 + $0x240] sm:$0xff]
    %v146 = vld [vmem:[#allocation5 + $0x248] sm:$0xff]
    %v147 = vld [vmem:[#allocation5 + $0x250] sm:$0xff]
    %v148 = vld [vmem:[#allocation5 + $0x258] sm:$0xff]
    %v149 = vld [vmem:[#allocation5 + $0x260] sm:$0xff]
    %v150 = vld [vmem:[#allocation5 + $0x268] sm:$0xff]
    %v151 = vld [vmem:[#allocation5 + $0x270] sm:$0xff]
    %v152 = vld [vmem:[#allocation5 + $0x278] sm:$0xff]
    %v153 = vld [vmem:[#allocation5 + $0x280] sm:$0xff]
    %v154 = vld [vmem:[#allocation5 + $0x288] sm:$0xff]
    %v155 = vld [vmem:[#allocation5 + $0x290] sm:$0xff]
    %v156 = vld [vmem:[#allocation5 + $0x298] sm:$0xff]
    %v157 = vld [vmem:[#allocation5 + $0x2a0] sm:$0xff]
    %v158 = vld [vmem:[#allocation5 + $0x2a8] sm:$0xff]
    %v159 = vld [vmem:[#allocation5 + $0x2b0] sm:$0xff]
    %v160 = vld [vmem:[#allocation5 + $0x2b8] sm:$0xff]
    %v161 = vld [vmem:[#allocation5 + $0x2c0] sm:$0xff]
    %v162 = vld [vmem:[#allocation5 + $0x2c8] sm:$0xff]
    %v163 = vld [vmem:[#allocation5 + $0x2d0] sm:$0xff]
    %v164 = vld [vmem:[#allocation5 + $0x2d8] sm:$0xff]
    %v165 = vld [vmem:[#allocation5 + $0x2e0] sm:$0xff]
    %v166 = vld [vmem:[#allocation5 + $0x2e8] sm:$0xff]
    %v167 = vld [vmem:[#allocation5 + $0x2f0] sm:$0xff]
    %v168 = vld [vmem:[#allocation5 + $0x2f8] sm:$0xff]
    %v169 = vld [vmem:[#allocation5 + $0x300] sm:$0xff]
    %v170 = vld [vmem:[#allocation5 + $0x308] sm:$0xff]
    %v171 = vld [vmem:[%s2] sm:$0x1]
    %v173 = vperm.slane %v171, 0
    %vm175 = vcmask 130048
    %v177 = vsel %vm175, %v72, 0
    %179 = vmatpush.msra.mxu0 %v88
    %180 = vmatpush.msra.mxu0 %v87
    %181 = vmatpush.msra.mxu0 %v86
    %182 = vmatpush.msra.mxu0 %v85
    %183 = vmatpush.msra.mxu0 %v84
    %184 = vmatpush.msra.mxu0 %v83
    %185 = vmatpush.msra.mxu0 %v82
    %186 = vmatpush.msra.mxu0 %v81
    %187 = vmatpush.msra.mxu0 %v80
    %188 = vmatpush.msra.mxu0 %v79
    %189 = vmatpush.msra.mxu0 %v78
    %190 = vmatpush.msra.mxu0 %v77
    %191 = vmatpush.msra.mxu0 %v76
    %192 = vmatpush.msra.mxu0 %v75
    %193 = vmatpush.msra.mxu0 %v74
    %194 = vmatpush.msra.mxu0 %v73
    %195 = vmatmul.f32.gmra.mxu0 %v66
    %v196 = vpop.f32.mrf.mxu0
    %v197 = vadd.f32 %v173, %v196
    %198 = vdwg.mxu0
    %199 = vmatpush.msra.mxu0 %v104
    %200 = vmatpush.msra.mxu0 %v103
    %201 = vmatpush.msra.mxu0 %v102
    %202 = vmatpush.msra.mxu0 %v101
    %203 = vmatpush.msra.mxu0 %v100
    %204 = vmatpush.msra.mxu0 %v99
    %205 = vmatpush.msra.mxu0 %v98
    %206 = vmatpush.msra.mxu0 %v97
    %207 = vmatpush.msra.mxu0 %v96
    %208 = vmatpush.msra.mxu0 %v95
    %209 = vmatpush.msra.mxu0 %v94
    %210 = vmatpush.msra.mxu0 %v93
    %211 = vmatpush.msra.mxu0 %v92
    %212 = vmatpush.msra.mxu0 %v91
    %213 = vmatpush.msra.mxu0 %v90
    %214 = vmatpush.msra.mxu0 %v89
    %215 = vmatmul.f32.gmra.mxu0 %v67
    %v216 = vpop.f32.mrf.mxu0
    %v217 = vadd.f32 %v197, %v216
    %218 = vdwg.mxu0
    %219 = vmatpush.msra.mxu0 %v120
    %220 = vmatpush.msra.mxu0 %v119
    %221 = vmatpush.msra.mxu0 %v118
    %222 = vmatpush.msra.mxu0 %v117
    %223 = vmatpush.msra.mxu0 %v116
    %224 = vmatpush.msra.mxu0 %v115
    %225 = vmatpush.msra.mxu0 %v114
    %226 = vmatpush.msra.mxu0 %v113
    %227 = vmatpush.msra.mxu0 %v112
    %228 = vmatpush.msra.mxu0 %v111
    %229 = vmatpush.msra.mxu0 %v110
    %230 = vmatpush.msra.mxu0 %v109
    %231 = vmatpush.msra.mxu0 %v108
    %232 = vmatpush.msra.mxu0 %v107
    %233 = vmatpush.msra.mxu0 %v106
    %234 = vmatpush.msra.mxu0 %v105
    %235 = vmatmul.f32.gmra.mxu0 %v68
    %v236 = vpop.f32.mrf.mxu0
    %v237 = vadd.f32 %v217, %v236
    %238 = vdwg.mxu0
    %239 = vmatpush.msra.mxu0 %v136
    %240 = vmatpush.msra.mxu0 %v135
    %241 = vmatpush.msra.mxu0 %v134
    %242 = vmatpush.msra.mxu0 %v133
    %243 = vmatpush.msra.mxu0 %v132
    %244 = vmatpush.msra.mxu0 %v131
    %245 = vmatpush.msra.mxu0 %v130
    %246 = vmatpush.msra.mxu0 %v129
    %247 = vmatpush.msra.mxu0 %v128
    %248 = vmatpush.msra.mxu0 %v127
    %249 = vmatpush.msra.mxu0 %v126
    %250 = vmatpush.msra.mxu0 %v125
    %251 = vmatpush.msra.mxu0 %v124
    %252 = vmatpush.msra.mxu0 %v123
    %253 = vmatpush.msra.mxu0 %v122
    %254 = vmatpush.msra.mxu0 %v121
    %255 = vmatmul.f32.gmra.mxu0 %v69
    %v256 = vpop.f32.mrf.mxu0
    %v257 = vadd.f32 %v237, %v256
    %258 = vdwg.mxu0
    %259 = vmatpush.msra.mxu0 %v152
    %260 = vmatpush.msra.mxu0 %v151
    %261 = vmatpush.msra.mxu0 %v150
    %262 = vmatpush.msra.mxu0 %v149
    %263 = vmatpush.msra.mxu0 %v148
    %264 = vmatpush.msra.mxu0 %v147
    %265 = vmatpush.msra.mxu0 %v146
    %266 = vmatpush.msra.mxu0 %v145
    %267 = vmatpush.msra.mxu0 %v144
    %268 = vmatpush.msra.mxu0 %v143
    %269 = vmatpush.msra.mxu0 %v142
    %270 = vmatpush.msra.mxu0 %v141
    %271 = vmatpush.msra.mxu0 %v140
    %272 = vmatpush.msra.mxu0 %v139
    %273 = vmatpush.msra.mxu0 %v138
    %274 = vmatpush.msra.mxu0 %v137
    %275 = vmatmul.f32.gmra.mxu0 %v70
    %v276 = vpop.f32.mrf.mxu0
    %v277 = vadd.f32 %v257, %v276
    %278 = vdwg.mxu0
    %279 = vmatpush.msra.mxu0 %v168
    %280 = vmatpush.msra.mxu0 %v167
    %281 = vmatpush.msra.mxu0 %v166
    %282 = vmatpush.msra.mxu0 %v165
    %283 = vmatpush.msra.mxu0 %v164
    %284 = vmatpush.msra.mxu0 %v163
    %285 = vmatpush.msra.mxu0 %v162
    %286 = vmatpush.msra.mxu0 %v161
    %287 = vmatpush.msra.mxu0 %v160
    %288 = vmatpush.msra.mxu0 %v159
    %289 = vmatpush.msra.mxu0 %v158
    %290 = vmatpush.msra.mxu0 %v157
    %291 = vmatpush.msra.mxu0 %v156
    %292 = vmatpush.msra.mxu0 %v155
    %293 = vmatpush.msra.mxu0 %v154
    %294 = vmatpush.msra.mxu0 %v153
    %295 = vmatmul.f32.gmra.mxu0 %v71
    %v296 = vpop.f32.mrf.mxu0
    %v297 = vadd.f32 %v277, %v296
    %298 = vdwg.mxu0
    %299 = vmatpush.msra.mxu0 0.0
    %300 = vmatpush.msra.mxu0 0.0
    %301 = vmatpush.msra.mxu0 0.0
    %302 = vmatpush.msra.mxu0 0.0
    %303 = vmatpush.msra.mxu0 0.0
    %304 = vmatpush.msra.mxu0 0.0
    %305 = vmatpush.msra.mxu0 0.0
    %306 = vmatpush.msra.mxu0 0.0
    %307 = vmatpush.msra.mxu0 0.0
    %308 = vmatpush.msra.mxu0 0.0
    %309 = vmatpush.msra.mxu0 0.0
    %310 = vmatpush.msra.mxu0 0.0
    %311 = vmatpush.msra.mxu0 0.0
    %312 = vmatpush.msra.mxu0 0.0
    %313 = vmatpush.msra.mxu0 %v170
    %314 = vmatpush.msra.mxu0 %v169
    %315 = vmatmul.f32.gmra.mxu0 %v177
    %v316 = vpop.f32.mrf.mxu0
    %v317 = vadd.f32 %v297, %v316
    %318 = vdwg.mxu0
    %v319 = vtanh.pop %v317
    %v320 = vld [vmem:[#allocation7] sm:$0xff]
    %v321 = vld [vmem:[#allocation7 + $0x8] sm:$0xff]
    %v322 = vld [vmem:[#allocation7 + $0x10] sm:$0xff]
    %v323 = vld [vmem:[#allocation7 + $0x18] sm:$0xff]
    %v324 = vld [vmem:[#allocation7 + $0x20] sm:$0xff]
    %v325 = vld [vmem:[#allocation7 + $0x28] sm:$0xff]
    %v326 = vld [vmem:[#allocation7 + $0x30] sm:$0xff]
    %v327 = vld [vmem:[#allocation7 + $0x38] sm:$0xff]
    %v328 = vld [vmem:[#allocation7 + $0x40] sm:$0xff]
    %v329 = vld [vmem:[#allocation7 + $0x48] sm:$0xff]
    %v330 = vld [vmem:[#allocation7 + $0x50] sm:$0xff]
    %v331 = vld [vmem:[#allocation7 + $0x58] sm:$0xff]
    %v332 = vld [vmem:[#allocation7 + $0x60] sm:$0xff]
    %v333 = vld [vmem:[#allocation7 + $0x68] sm:$0xff]
    %v334 = vld [vmem:[#allocation7 + $0x70] sm:$0xff]
    %v335 = vld [vmem:[#allocation7 + $0x78] sm:$0xff]
    %v336 = vld [vmem:[%s4] sm:$0x1]
    %v338 = vperm.slane %v336, 0
    %340 = vmatpush.msra.mxu0 %v335
    %341 = vmatpush.msra.mxu0 %v334
    %342 = vmatpush.msra.mxu0 %v333
    %343 = vmatpush.msra.mxu0 %v332
    %344 = vmatpush.msra.mxu0 %v331
    %345 = vmatpush.msra.mxu0 %v330
    %346 = vmatpush.msra.mxu0 %v329
    %347 = vmatpush.msra.mxu0 %v328
    %348 = vmatpush.msra.mxu0 %v327
    %349 = vmatpush.msra.mxu0 %v326
    %350 = vmatpush.msra.mxu0 %v325
    %351 = vmatpush.msra.mxu0 %v324
    %352 = vmatpush.msra.mxu0 %v323
    %353 = vmatpush.msra.mxu0 %v322
    %354 = vmatpush.msra.mxu0 %v321
    %355 = vmatpush.msra.mxu0 %v320
    %356 = vmatmul.f32.gmra.mxu0 %v319
    %v357 = vpop.f32.mrf.mxu0
    %v358 = vadd.f32 %v338, %v357
    %359 = vdwg.mxu0
    %360 = vmax.xlane.f32.xlu0 %v358
    %v361 = vpop.xlane.xlu0 %360
    %v362 = vsub.f32 %v358, %v361
    %v363 = vmul.f32 %v362, 1.442695
    %v364 = vpow.pop %v363
    %365 = vadd.xlane.f32.xlu0 %v364
    %v366 = vpop.xlane.xlu0 %365
    %v367 = vlog2.pop %v366
    %v368 = vmul.f32 %v367, 0.6931472
    %v369 = vsub.f32 %v362, %v368
    %370 = vst [vmem:[#allocation8] sm:$0xff] %v369
    // Predicated region
    $region34: #{tpu_custom_call.1} parent=1 // pred_check
      _
    $region35: #{tpu_custom_call.1} parent=1 // pred_check_branch
      %372 = sbr.rel (0) target = $region37
    $region36: #{tpu_custom_call.1} parent=1 // pred_region
      %374 = vsyncadd [#allocation4], 0
      %s376 = sshll.u32 [#allocation8], 4
      %s377 = int_to_ptr.vmem [resolvable:$true] %s376
      %s378 = sshll.u32 %s5, 4
      %s379 = int_to_ptr.hbm [resolvable:$true] %s378
      %381 = dma.vmem_to_hbm [thread:$0]  %s377, 128, %s379, [#allocation4]
    $region37: #{tpu_custom_call.1} parent=1 // pred_fallthru
      _
    // Predicated region
    $region38: #{tpu_custom_call.1} parent=1 // pred_check
      _
    $region39: #{tpu_custom_call.1} parent=1 // pred_check_branch
      %383 = sbr.rel (0) target = $region41
    $region40: #{tpu_custom_call.1} parent=1 // pred_region
      %385 = dma.done [#allocation4], 128
    $region41: #{tpu_custom_call.1} parent=1 // pred_fallthru
      _
    %386 = vsyncpa [#allocation3], 1
    %387 = vsyncpa [#allocation6], 1
    %388 = vsyncpa [#allocation4], 1

</llo_original>
